<compile_context>
chip_gen: v7x
topology: tpu7x:2x2x1
jax: 0.10.0
libtpu: 0.0.40
codegen_flags: <defaults>
</compile_context>

<pallas_src>
import math

import jax
import jax.numpy as jnp
from jax import lax
from jax.experimental import pallas as pl
from jax.experimental.pallas import tpu as pltpu


def _self_attention_kernel(norm_fact, dim_k, dim_v, use_bf16_matmul):
    """Builds the attention kernel; processes a (Bb, N, D) block per grid step."""
    mm_dtype = jnp.bfloat16 if use_bf16_matmul else jnp.float32

    def kernel(x_ref, wqkv_ref, o_ref):
        bb, n, d = x_ref.shape

        # --- Fused QKV projection: one MXU matmul over all Bb*N rows. ---
        x2d = x_ref[...].reshape(bb * n, d).astype(mm_dtype)          # (Bb*N, D)
        w = wqkv_ref[...].astype(mm_dtype)                            # (D, 2*dk+dv)
        qkv = jnp.dot(x2d, w, preferred_element_type=jnp.float32)     # (Bb*N, 2*dk+dv)
        qkv = qkv.reshape(bb, n, 2 * dim_k + dim_v)

        q = qkv[:, :, :dim_k]                                         # (Bb, N, dk)
        k = qkv[:, :, dim_k:2 * dim_k]                                # (Bb, N, dk)
        v = qkv[:, :, 2 * dim_k:]                                     # (Bb, N, dv)

        # --- Scores: batched matmul contracting last axes (no k.T). ---
        s = lax.dot_general(
            q, k,
            dimension_numbers=(((2,), (2,)), ((0,), (0,))),
            preferred_element_type=jnp.float32)                       # (Bb, N, N)

        # --- Numerically-stable softmax in f32; EUP reciprocal for the
        #     normalization, with the post-softmax 1/sqrt(dk) scale folded in. ---
        s_max = jnp.max(s, axis=-1, keepdims=True)
        e = jnp.exp(s - s_max)
        denom = jnp.sum(e, axis=-1, keepdims=True)
        attn = e * (pl.reciprocal(denom, approx=True) * norm_fact)    # (Bb, N, N)

        # --- Output: attn @ V (batched). ---
        out = lax.dot_general(
            attn.astype(mm_dtype), v.astype(mm_dtype),
            dimension_numbers=(((2,), (1,)), ((0,), (0,))),
            preferred_element_type=jnp.float32)                       # (Bb, N, dv)

        o_ref[...] = out.astype(o_ref.dtype)

    return kernel


def self_attention_pallas(x, w_q, w_k, w_v, *, batch_block=None,
                          use_bf16_matmul=False):
    """x: (B, N, D) f32. w_q/w_k: (D, dim_k), w_v: (D, dim_v). Returns (B, N, dim_v)."""
    B, N, D = x.shape
    dim_k = w_q.shape[1]
    dim_v = w_v.shape[1]
    norm_fact = 1.0 / math.sqrt(dim_k)

    # Default: fully collapsed grid (single step) -- best on v5e/v6e (1 TC)
    # at small B where fixed per-step overhead dominates.  On v7x (2 TCs)
    # pass batch_block=B//2 so the parallel batch axis feeds both cores.
    if batch_block is None:
        batch_block = B
    assert B % batch_block == 0, "batch_block must divide batch size"

    # Host-side fusion of the three projection weights.
    w_qkv = jnp.concatenate([w_q, w_k, w_v], axis=1)                  # (D, 2*dk+dv)

    kernel = _self_attention_kernel(norm_fact, dim_k, dim_v, use_bf16_matmul)

    grid = (B // batch_block,)
    return pl.pallas_call(
        kernel,
        out_shape=jax.ShapeDtypeStruct((B, N, dim_v), jnp.float32),
        grid_spec=pl.GridSpec(
            grid=grid,
            in_specs=[
                # Bb batch elements per step; N and D are the full array dims.
                pl.BlockSpec((batch_block, N, D), lambda b: (b, 0, 0)),
                # Fused weights: constant index map -> stays resident in VMEM.
                pl.BlockSpec((D, 2 * dim_k + dim_v), lambda b: (0, 0)),
            ],
            out_specs=pl.BlockSpec((batch_block, N, dim_v), lambda b: (b, 0, 0)),
        ),
        compiler_params=pltpu.CompilerParams(
            dimension_semantics=("parallel",),
        ),
    )(x, w_qkv)


def self_attention_ref(x, w_q, w_k, w_v):
    """Pure-JAX reference mirroring the PyTorch forward."""
    dim_k = w_q.shape[1]
    norm_fact = 1.0 / math.sqrt(dim_k)
    q = x @ w_q
    k = x @ w_k
    v = x @ w_v
    s = jnp.einsum("bnd,bmd->bnm", q, k)
    attn = jax.nn.softmax(s, axis=-1) * norm_fact
    return jnp.einsum("bnm,bmv->bnv", attn, v)


if __name__ == "__main__":
    # Small shapes consistent with the module: batch=2, seq=8, hidden=32.
    B, N, D = 2, 8, 32
    dim_k, dim_v = D, D  # module defaults when dim_k/dim_v are not specified

    key = jax.random.PRNGKey(0)
    kx, kq, kk, kv = jax.random.split(key, 4)

    x = jax.random.normal(kx, (B, N, D), dtype=jnp.float32)
    # Deterministic parameter init (analogue of nn.Linear's uniform init range).
    bound = 1.0 / math.sqrt(D)
    w_q = jax.random.uniform(kq, (D, dim_k), jnp.float32, -bound, bound)
    w_k = jax.random.uniform(kk, (D, dim_k), jnp.float32, -bound, bound)
    w_v = jax.random.uniform(kv, (D, dim_v), jnp.float32, -bound, bound)

    out = self_attention_pallas(x, w_q, w_k, w_v)
    out = jax.block_until_ready(out)

    ref = self_attention_ref(x, w_q, w_k, w_v)
    assert out.shape == (B, N, dim_v)
    # Tolerance covers the EUP approximate-reciprocal softmax normalization.
    assert jnp.allclose(out, ref, atol=2e-3, rtol=2e-3), "mismatch vs reference"

    print("KERNEL_OK")
</pallas_src>

<mosaic_0001>
module attributes {stable_mosaic.version = 11 : i64} {
  func.func @kernel(%arg0: i32, %arg1: memref<2x8x32xf32, #tpu.memory_space<vmem>>, %arg2: memref<32x96xf32, #tpu.memory_space<vmem>>, %arg3: memref<2x8x32xf32, #tpu.memory_space<vmem>>) attributes {dimension_semantics = [#tpu.dimension_semantics<parallel>], iteration_bounds = array<i64: 1>, scalar_prefetch = 0 : i64, scratch_operands = 0 : i64, tpu.core_type = #tpu.core_type<tc>, window_params = [{transform_indices = @transform_0, window_bounds = array<i64: 2, 8, 32>}, {pipeline_mode = #tpu.pipeline_mode<synchronous>, transform_indices = @transform_1, window_bounds = array<i64: 32, 96>}, {transform_indices = @transform_2, window_bounds = array<i64: 2, 8, 32>}]} {
    %c0 = arith.constant 0 : index
    %c0_0 = arith.constant 0 : index
    %c0_1 = arith.constant 0 : index
    %0 = vector.load %arg1[%c0, %c0_0, %c0_1] : memref<2x8x32xf32, #tpu.memory_space<vmem>>, vector<2x8x32xf32>
    %1 = vector.shape_cast %0 : vector<2x8x32xf32> to vector<16x32xf32>
    %c0_2 = arith.constant 0 : index
    %c0_3 = arith.constant 0 : index
    %2 = vector.load %arg2[%c0_2, %c0_3] : memref<32x96xf32, #tpu.memory_space<vmem>>, vector<32x96xf32>
    %cst = arith.constant dense<0.000000e+00> : vector<16x96xf32>
    %3 = tpu.matmul %1, %2, %cst {dimension_numbers = #tpu.dot_dimension_numbers<[1], [0], [0], [1], [0, 0, 1, 1], [], []>} : vector<16x32xf32>, vector<32x96xf32>, vector<16x96xf32> -> vector<16x96xf32>
    %4 = vector.shape_cast %3 : vector<16x96xf32> to vector<2x8x96xf32>
    %5 = vector.extract_strided_slice %4 {offsets = [0, 0, 0], sizes = [2, 8, 32], strides = [1, 1, 1]} : vector<2x8x96xf32> to vector<2x8x32xf32>
    %6 = vector.extract_strided_slice %4 {offsets = [0, 0, 32], sizes = [2, 8, 32], strides = [1, 1, 1]} : vector<2x8x96xf32> to vector<2x8x32xf32>
    %7 = vector.extract_strided_slice %4 {offsets = [0, 0, 64], sizes = [2, 8, 32], strides = [1, 1, 1]} : vector<2x8x96xf32> to vector<2x8x32xf32>
    %cst_4 = arith.constant dense<0.000000e+00> : vector<2x8x8xf32>
    %8 = tpu.matmul %5, %6, %cst_4 {dimension_numbers = #tpu.dot_dimension_numbers<[2], [2], [1], [1], [0, 0, 0, 1, 1, 1], [0], [0]>} : vector<2x8x32xf32>, vector<2x8x32xf32>, vector<2x8x8xf32> -> vector<2x8x8xf32>
    %cst_5 = arith.constant dense<0xFF800000> : vector<2x8xf32>
    %9 = vector.multi_reduction <maximumf>, %8, %cst_5 [2] : vector<2x8x8xf32> to vector<2x8xf32>
    %10 = vector.shape_cast %9 : vector<2x8xf32> to vector<2x8x1xf32>
    %11 = vector.broadcast %10 : vector<2x8x1xf32> to vector<2x8x8xf32>
    %12 = arith.subf %8, %11 : vector<2x8x8xf32>
    %13 = math.exp %12 : vector<2x8x8xf32>
    %cst_6 = arith.constant dense<0.000000e+00> : vector<2x8xf32>
    %14 = vector.multi_reduction <add>, %13, %cst_6 [2] : vector<2x8x8xf32> to vector<2x8xf32>
    %15 = vector.shape_cast %14 : vector<2x8xf32> to vector<2x8x1xf32>
    %16 = tpu.reciprocal %15 {approx = true} : vector<2x8x1xf32> -> vector<2x8x1xf32>
    %cst_7 = arith.constant 0.176776692 : f32
    %17 = vector.broadcast %cst_7 : f32 to vector<2x8x1xf32>
    %18 = arith.mulf %16, %17 : vector<2x8x1xf32>
    %19 = vector.broadcast %18 : vector<2x8x1xf32> to vector<2x8x8xf32>
    %20 = arith.mulf %13, %19 : vector<2x8x8xf32>
    %cst_8 = arith.constant dense<0.000000e+00> : vector<2x8x32xf32>
    %21 = tpu.matmul %20, %7, %cst_8 {dimension_numbers = #tpu.dot_dimension_numbers<[2], [1], [1], [2], [0, 0, 0, 1, 1, 2], [0], [0]>} : vector<2x8x8xf32>, vector<2x8x32xf32>, vector<2x8x32xf32> -> vector<2x8x32xf32>
    %c0_9 = arith.constant 0 : index
    %c0_10 = arith.constant 0 : index
    %c0_11 = arith.constant 0 : index
    %22 = vector.load %arg3[%c0_9, %c0_10, %c0_11] : memref<2x8x32xf32, #tpu.memory_space<vmem>>, vector<2x8x32xf32>
    tpu.vector_store %arg3[%c0_9, %c0_10, %c0_11], %21 {strides = array<i32>} : memref<2x8x32xf32, #tpu.memory_space<vmem>>, vector<2x8x32xf32>,
    return
  }
  func.func @transform_0(%arg0: i32) -> (i32, i32, i32) {
    %c0_i32 = arith.constant 0 : i32
    %c0_i32_0 = arith.constant 0 : i32
    %c0_i32_1 = arith.constant 0 : i32
    return %arg0, %c0_i32, %c0_i32_0 : i32, i32, i32
  }
  func.func @transform_1(%arg0: i32) -> (i32, i32) {
    %c0_i32 = arith.constant 0 : i32
    %c0_i32_0 = arith.constant 0 : i32
    %c0_i32_1 = arith.constant 0 : i32
    return %c0_i32, %c0_i32_0 : i32, i32
  }
  func.func @transform_2(%arg0: i32) -> (i32, i32, i32) {
    %c0_i32 = arith.constant 0 : i32
    %c0_i32_0 = arith.constant 0 : i32
    %c0_i32_1 = arith.constant 0 : i32
    return %arg0, %c0_i32, %c0_i32_0 : i32, i32, i32
  }
}

</mosaic_0001>

<llo_original>
// kernel: tpu_custom_call.1
$region0: #{tpu_custom_call.1}
  #allocation0 [shape = 'u32[]', space=smem, size = 0x4, offset = 0x4, fixed_abs, tag = 'smem constant byte address 0x4 - core index']
  #allocation1 [shape = 'u32[144,128]{1,0:T(1,128)}', space=vmem, size = 0x12000, scoped, tag = 'internal scratch']
  %s0 = inlined_call_operand.hbm [shape: f32[2,8,32], index: 0, kind: input, shape index: {}]
  %s1 = inlined_call_operand.hbm [shape: f32[32,96], index: 1, kind: input, shape index: {}]
  %s2 = inlined_call_operand.hbm [shape: f32[2,8,32], index: 2, kind: output, shape index: {}]
  %s3 = sld [smem:[#allocation0]]
  $region26: #{tpu_custom_call.1} parent=0
    _
  %s5 = ssub.s32 1, %s3
  %s6 = scalar_select 0, %s5, %s3
  $region1: #{tpu_custom_call.1} parent=0
    #allocation2 [shape = 'u8[8192]{0}', space=vmem, size = 0x2000, scoped, tag = 'input window, operand 0, single buffered']
    #allocation3 [shape = 's32[1]{0}', space=sflag, size = 0x4, scoped, tag = 'scoped memory for tpu_custom_call.1']
    #allocation4 [shape = 's32[1]{0}', space=sflag, size = 0x4, scoped, tag = 'scoped memory for tpu_custom_call.1']
    #allocation5 [shape = 'u8[16384]{0}', space=vmem, size = 0x4000, scoped, tag = 'input window, operand 1, single buffered']
    #allocation6 [shape = 's32[1]{0}', space=sflag, size = 0x4, scoped, tag = 'scoped memory for tpu_custom_call.1']
    #allocation7 [shape = 'u8[8192]{0}', space=vmem, size = 0x2000, scoped, tag = 'output window, operand 0, single buffered']
    %7 = vsyncpa [#allocation3], 0
    %8 = vsyncpa [#allocation6], 0
    %9 = vsyncpa [#allocation4], 0
    // Predicated region
    $region2: #{tpu_custom_call.1} parent=1 // pred_check
      _
    $region3: #{tpu_custom_call.1} parent=1 // pred_check_branch
      %11 = sbr.rel (0) target = $region5
    $region4: #{tpu_custom_call.1} parent=1 // pred_region
      %s13 = ssub.s32 256, 256
      %14 = vsyncadd [#allocation3], %s13
      %s15 = sshll.u32 [#allocation2], 4
      %s16 = int_to_ptr.vmem [resolvable:$true] %s15
      %21 = dma.hbm_to_vmem [thread:$0]  %s0, 256, %s16, [#allocation3], 128, 128, 8
    $region5: #{tpu_custom_call.1} parent=1 // pred_fallthru
      _
    // Predicated region
    $region6: #{tpu_custom_call.1} parent=1 // pred_check
      _
    $region7: #{tpu_custom_call.1} parent=1 // pred_check_branch
      %23 = sbr.rel (0) target = $region9
    $region8: #{tpu_custom_call.1} parent=1 // pred_region
      %s25 = ssub.s32 512, 512
      %26 = vsyncadd [#allocation6], %s25
      %s27 = sshll.u32 [#allocation5], 4
      %s28 = int_to_ptr.vmem [resolvable:$true] %s27
      %33 = dma.hbm_to_vmem [thread:$0]  %s1, 512, %s28, [#allocation6], 128, 128, 8
    $region9: #{tpu_custom_call.1} parent=1 // pred_fallthru
      _
    // Predicated region
    $region10: #{tpu_custom_call.1} parent=1 // pred_check
      _
    $region11: #{tpu_custom_call.1} parent=1 // pred_check_branch
      %35 = sbr.rel (0) target = $region13
    $region12: #{tpu_custom_call.1} parent=1 // pred_region
      %36 = dma.done [#allocation3], 256
    $region13: #{tpu_custom_call.1} parent=1 // pred_fallthru
      _
    // Predicated region
    $region14: #{tpu_custom_call.1} parent=1 // pred_check
      _
    $region15: #{tpu_custom_call.1} parent=1 // pred_check_branch
      %38 = sbr.rel (0) target = $region17
    $region16: #{tpu_custom_call.1} parent=1 // pred_region
      %39 = dma.done [#allocation6], 512
    $region17: #{tpu_custom_call.1} parent=1 // pred_fallthru
      _
    %v40 = vld [vmem:[#allocation2] sm:$0xff]
    %v41 = vld [vmem:[#allocation2 + $0x8] sm:$0xff]
    %v42 = vld [vmem:[#allocation5] sm:$0xff]
    %v43 = vld [vmem:[#allocation5 + $0x8] sm:$0xff]
    %v44 = vld [vmem:[#allocation5 + $0x10] sm:$0xff]
    %v45 = vld [vmem:[#allocation5 + $0x18] sm:$0xff]
    %vm46 = vcmask 261120
    %v48 = vsel %vm46, %v40, 0
    %v51 = vsel %vm46, %v41, 0
    %53 = vmatprep.subr.mxu0 0.0
    %54 = vmatpush1.msra.mxu0 %v42
    %55 = vmatprep.subr.mxu0 0.0
    %56 = vmatpush1.msra.mxu0 %v43
    %57 = vmatprep.subr.mxu0 0.0
    %58 = vmatpush1.msra.mxu0 %v44
    %59 = vmatprep.subr.mxu0 0.0
    %60 = vmatpush1.msra.mxu0 %v45
    %61 = vmatprep.subr.mxu0 0.0
    %62 = vmatpush1.msra.mxu0 0.0
    %63 = vmatprep.subr.mxu0 0.0
    %64 = vmatpush1.msra.mxu0 0.0
    %65 = vmatprep.subr.mxu0 0.0
    %66 = vmatpush1.msra.mxu0 0.0
    %67 = vmatprep.subr.mxu0 0.0
    %68 = vmatpush1.msra.mxu0 0.0
    %69 = vmatprep.subr.mxu0 0.0
    %70 = vmatpush1.msra.mxu0 0.0
    %71 = vmatprep.subr.mxu0 0.0
    %72 = vmatpush1.msra.mxu0 0.0
    %73 = vmatprep.subr.mxu0 0.0
    %74 = vmatpush1.msra.mxu0 0.0
    %75 = vmatprep.subr.mxu0 0.0
    %76 = vmatpush1.msra.mxu0 0.0
    %77 = vmatprep.subr.mxu0 0.0
    %78 = vmatpush1.msra.mxu0 0.0
    %79 = vmatprep.subr.mxu0 0.0
    %80 = vmatpush1.msra.mxu0 0.0
    %81 = vmatprep.subr.mxu0 0.0
    %82 = vmatpush1.msra.mxu0 0.0
    %83 = vmatprep.subr.mxu0 0.0
    %84 = vmatpush1.msra.mxu0 0.0
    %85 = vmatprep.subr.mxu0 0.0
    %86 = vmatpush1.msra.mxu0 0.0
    %87 = vmatprep.subr.mxu0 0.0
    %88 = vmatpush1.msra.mxu0 0.0
    %89 = vmatprep.subr.mxu0 0.0
    %90 = vmatpush1.msra.mxu0 0.0
    %91 = vmatprep.subr.mxu0 0.0
    %92 = vmatpush1.msra.mxu0 0.0
    %93 = vmatprep.subr.mxu0 0.0
    %94 = vmatpush1.msra.mxu0 0.0
    %95 = vmatprep.subr.mxu0 0.0
    %96 = vmatpush1.msra.mxu0 0.0
    %97 = vmatprep.subr.mxu0 0.0
    %98 = vmatpush1.msra.mxu0 0.0
    %99 = vmatprep.subr.mxu0 0.0
    %100 = vmatpush1.msra.mxu0 0.0
    %101 = vmatprep.subr.mxu0 0.0
    %102 = vmatpush1.msra.mxu0 0.0
    %103 = vmatprep.subr.mxu0 0.0
    %104 = vmatpush1.msra.mxu0 0.0
    %105 = vmatprep.subr.mxu0 0.0
    %106 = vmatpush1.msra.mxu0 0.0
    %107 = vmatprep.subr.mxu0 0.0
    %108 = vmatpush1.msra.mxu0 0.0
    %109 = vmatprep.subr.mxu0 0.0
    %110 = vmatpush1.msra.mxu0 0.0
    %111 = vmatprep.subr.mxu0 0.0
    %112 = vmatpush1.msra.mxu0 0.0
    %113 = vmatprep.subr.mxu0 0.0
    %114 = vmatpush1.msra.mxu0 0.0
    %115 = vmatprep.subr.mxu0 0.0
    %116 = vmatpush1.msra.mxu0 0.0
    %117 = vmatprep.mubr.f32.mxu0 0.0
    %118 = vmatmul.mubr.f32.gmra.mrb[0].mxu0 %v48
    %v119 = vpop.f32.mrb[0].mxu0
    %v120 = vadd.f32 0.0, %v119
    %v121 = vpop.f32.mrb[0].mxu0
    %122 = vmatprep.mubr.f32.mxu0 0.0
    %123 = vmatmul.mubr.f32.gmra.mrb[0].mxu0 %v51
    %v124 = vpop.f32.mrb[0].mxu0
    %v125 = vadd.f32 0.0, %v124
    %v126 = vpop.f32.mrb[0].mxu0
    %127 = vdwg.mxu0
    %129 = vrot.lane.b32.xlu0 %v120, 96
    %v130 = vpop.permute.xlu0 %129
    %v131 = vsel %vm46, %v120, 0
    %v133 = vsel %vm46, %v130, 0
    %135 = vmatprep.subr.mxu0 0.0
    %136 = vmatpush1.xpose.msra.mxu0 %v133
    %137 = vmatprep.subr.mxu0 0.0
    %138 = vmatpush1.xpose.msra.mxu0 0.0
    %139 = vmatprep.subr.mxu0 0.0
    %140 = vmatpush1.xpose.msra.mxu0 0.0
    %141 = vmatprep.subr.mxu0 0.0
    %142 = vmatpush1.xpose.msra.mxu0 0.0
    %143 = vmatprep.subr.mxu0 0.0
    %144 = vmatpush1.xpose.msra.mxu0 0.0
    %145 = vmatprep.subr.mxu0 0.0
    %146 = vmatpush1.xpose.msra.mxu0 0.0
    %147 = vmatprep.subr.mxu0 0.0
    %148 = vmatpush1.xpose.msra.mxu0 0.0
    %149 = vmatprep.subr.mxu0 0.0
    %150 = vmatpush1.xpose.msra.mxu0 0.0
    %151 = vmatprep.subr.mxu0 0.0
    %152 = vmatpush1.xpose.msra.mxu0 0.0
    %153 = vmatprep.subr.mxu0 0.0
    %154 = vmatpush1.xpose.msra.mxu0 0.0
    %155 = vmatprep.subr.mxu0 0.0
    %156 = vmatpush1.xpose.msra.mxu0 0.0
    %157 = vmatprep.subr.mxu0 0.0
    %158 = vmatpush1.xpose.msra.mxu0 0.0
    %159 = vmatprep.subr.mxu0 0.0
    %160 = vmatpush1.xpose.msra.mxu0 0.0
    %161 = vmatprep.subr.mxu0 0.0
    %162 = vmatpush1.xpose.msra.mxu0 0.0
    %163 = vmatprep.subr.mxu0 0.0
    %164 = vmatpush1.xpose.msra.mxu0 0.0
    %165 = vmatprep.subr.mxu0 0.0
    %166 = vmatpush1.xpose.msra.mxu0 0.0
    %167 = vmatprep.subr.mxu0 0.0
    %168 = vmatpush1.xpose.msra.mxu0 0.0
    %169 = vmatprep.subr.mxu0 0.0
    %170 = vmatpush1.xpose.msra.mxu0 0.0
    %171 = vmatprep.subr.mxu0 0.0
    %172 = vmatpush1.xpose.msra.mxu0 0.0
    %173 = vmatprep.subr.mxu0 0.0
    %174 = vmatpush1.xpose.msra.mxu0 0.0
    %175 = vmatprep.subr.mxu0 0.0
    %176 = vmatpush1.xpose.msra.mxu0 0.0
    %177 = vmatprep.subr.mxu0 0.0
    %178 = vmatpush1.xpose.msra.mxu0 0.0
    %179 = vmatprep.subr.mxu0 0.0
    %180 = vmatpush1.xpose.msra.mxu0 0.0
    %181 = vmatprep.subr.mxu0 0.0
    %182 = vmatpush1.xpose.msra.mxu0 0.0
    %183 = vmatprep.subr.mxu0 0.0
    %184 = vmatpush1.xpose.msra.mxu0 0.0
    %185 = vmatprep.subr.mxu0 0.0
    %186 = vmatpush1.xpose.msra.mxu0 0.0
    %187 = vmatprep.subr.mxu0 0.0
    %188 = vmatpush1.xpose.msra.mxu0 0.0
    %189 = vmatprep.subr.mxu0 0.0
    %190 = vmatpush1.xpose.msra.mxu0 0.0
    %191 = vmatprep.subr.mxu0 0.0
    %192 = vmatpush1.xpose.msra.mxu0 0.0
    %193 = vmatprep.subr.mxu0 0.0
    %194 = vmatpush1.xpose.msra.mxu0 0.0
    %195 = vmatprep.subr.mxu0 0.0
    %196 = vmatpush1.xpose.msra.mxu0 0.0
    %197 = vmatprep.subr.mxu0 0.0
    %198 = vmatpush1.xpose.msra.mxu0 0.0
    %199 = vmatprep.mubr.f32.mxu0 0.0
    %200 = vmatmul.mubr.f32.gmra.mrb[0].mxu0 %v131
    %v201 = vpop.f32.mrb[0].mxu0
    %v202 = vadd.f32 0.0, %v201
    %v203 = vpop.f32.mrb[0].mxu0
    %204 = vdwg.mxu0
    %206 = vrot.lane.b32.xlu0 %v125, 96
    %v207 = vpop.permute.xlu0 %206
    %v208 = vsel %vm46, %v125, 0
    %v210 = vsel %vm46, %v207, 0
    %212 = vmatprep.subr.mxu0 0.0
    %213 = vmatpush1.xpose.msra.mxu0 %v210
    %214 = vmatprep.subr.mxu0 0.0
    %215 = vmatpush1.xpose.msra.mxu0 0.0
    %216 = vmatprep.subr.mxu0 0.0
    %217 = vmatpush1.xpose.msra.mxu0 0.0
    %218 = vmatprep.subr.mxu0 0.0
    %219 = vmatpush1.xpose.msra.mxu0 0.0
    %220 = vmatprep.subr.mxu0 0.0
    %221 = vmatpush1.xpose.msra.mxu0 0.0
    %222 = vmatprep.subr.mxu0 0.0
    %223 = vmatpush1.xpose.msra.mxu0 0.0
    %224 = vmatprep.subr.mxu0 0.0
    %225 = vmatpush1.xpose.msra.mxu0 0.0
    %226 = vmatprep.subr.mxu0 0.0
    %227 = vmatpush1.xpose.msra.mxu0 0.0
    %228 = vmatprep.subr.mxu0 0.0
    %229 = vmatpush1.xpose.msra.mxu0 0.0
    %230 = vmatprep.subr.mxu0 0.0
    %231 = vmatpush1.xpose.msra.mxu0 0.0
    %232 = vmatprep.subr.mxu0 0.0
    %233 = vmatpush1.xpose.msra.mxu0 0.0
    %234 = vmatprep.subr.mxu0 0.0
    %235 = vmatpush1.xpose.msra.mxu0 0.0
    %236 = vmatprep.subr.mxu0 0.0
    %237 = vmatpush1.xpose.msra.mxu0 0.0
    %238 = vmatprep.subr.mxu0 0.0
    %239 = vmatpush1.xpose.msra.mxu0 0.0
    %240 = vmatprep.subr.mxu0 0.0
    %241 = vmatpush1.xpose.msra.mxu0 0.0
    %242 = vmatprep.subr.mxu0 0.0
    %243 = vmatpush1.xpose.msra.mxu0 0.0
    %244 = vmatprep.subr.mxu0 0.0
    %245 = vmatpush1.xpose.msra.mxu0 0.0
    %246 = vmatprep.subr.mxu0 0.0
    %247 = vmatpush1.xpose.msra.mxu0 0.0
    %248 = vmatprep.subr.mxu0 0.0
    %249 = vmatpush1.xpose.msra.mxu0 0.0
    %250 = vmatprep.subr.mxu0 0.0
    %251 = vmatpush1.xpose.msra.mxu0 0.0
    %252 = vmatprep.subr.mxu0 0.0
    %253 = vmatpush1.xpose.msra.mxu0 0.0
    %254 = vmatprep.subr.mxu0 0.0
    %255 = vmatpush1.xpose.msra.mxu0 0.0
    %256 = vmatprep.subr.mxu0 0.0
    %257 = vmatpush1.xpose.msra.mxu0 0.0
    %258 = vmatprep.subr.mxu0 0.0
    %259 = vmatpush1.xpose.msra.mxu0 0.0
    %260 = vmatprep.subr.mxu0 0.0
    %261 = vmatpush1.xpose.msra.mxu0 0.0
    %262 = vmatprep.subr.mxu0 0.0
    %263 = vmatpush1.xpose.msra.mxu0 0.0
    %264 = vmatprep.subr.mxu0 0.0
    %265 = vmatpush1.xpose.msra.mxu0 0.0
    %266 = vmatprep.subr.mxu0 0.0
    %267 = vmatpush1.xpose.msra.mxu0 0.0
    %268 = vmatprep.subr.mxu0 0.0
    %269 = vmatpush1.xpose.msra.mxu0 0.0
    %270 = vmatprep.subr.mxu0 0.0
    %271 = vmatpush1.xpose.msra.mxu0 0.0
    %272 = vmatprep.subr.mxu0 0.0
    %273 = vmatpush1.xpose.msra.mxu0 0.0
    %274 = vmatprep.subr.mxu0 0.0
    %275 = vmatpush1.xpose.msra.mxu0 0.0
    %276 = vmatprep.mubr.f32.mxu0 0.0
    %277 = vmatmul.mubr.f32.gmra.mrb[0].mxu0 %v208
    %v278 = vpop.f32.mrb[0].mxu0
    %v279 = vadd.f32 0.0, %v278
    %v280 = vpop.f32.mrb[0].mxu0
    %281 = vdwg.mxu0
    %vm282 = vcmask 64512
    %v283 = vsel %vm282, %v202, -inf
    %284 = vmax.xlane.f32.xlu0 %v283
    %v285 = vpop.xlane.xlu0 %284
    %v286 = vsel %vm282, %v279, -inf
    %287 = vmax.xlane.f32.xlu0 %v286
    %v288 = vpop.xlane.xlu0 %287
    %v289 = vsub.f32 %v202, %v285
    %v290 = vsub.f32 %v279, %v288
    %v291 = vmul.f32 %v289, 1.442695
    %v292 = vpow.pop %v291
    %v293 = vmul.f32 %v290, 1.442695
    %v294 = vpow.pop %v293
    %v295 = vsel %vm282, %v292, 0.0
    %296 = vadd.xlane.f32.xlu0 %v295
    %v297 = vpop.xlane.xlu0 %296
    %v298 = vsel %vm282, %v294, 0.0
    %299 = vadd.xlane.f32.xlu0 %v298
    %v300 = vpop.xlane.xlu0 %299
    %v301 = vrcp.pop %v297
    %v302 = vrcp.pop %v300
    %v303 = vmul.f32 %v301, 0.17677669
    %v304 = vmul.f32 %v302, 0.17677669
    %v305 = vmul.f32 %v292, %v303
    %v306 = vmul.f32 %v294, %v304
    %307 = vrot.lane.b32.xlu0 %v120, 64
    %v308 = vpop.permute.xlu0 %307
    %v311 = vsel %vm282, %v305, 0
    %313 = vmatprep.subr.mxu0 0.0
    %314 = vmatpush1.msra.mxu0 %v308
    %315 = vmatprep.subr.mxu0 0.0
    %316 = vmatpush1.msra.mxu0 0.0
    %317 = vmatprep.subr.mxu0 0.0
    %318 = vmatpush1.msra.mxu0 0.0
    %319 = vmatprep.subr.mxu0 0.0
    %320 = vmatpush1.msra.mxu0 0.0
    %321 = vmatprep.subr.mxu0 0.0
    %322 = vmatpush1.msra.mxu0 0.0
    %323 = vmatprep.subr.mxu0 0.0
    %324 = vmatpush1.msra.mxu0 0.0
    %325 = vmatprep.subr.mxu0 0.0
    %326 = vmatpush1.msra.mxu0 0.0
    %327 = vmatprep.subr.mxu0 0.0
    %328 = vmatpush1.msra.mxu0 0.0
    %329 = vmatprep.subr.mxu0 0.0
    %330 = vmatpush1.msra.mxu0 0.0
    %331 = vmatprep.subr.mxu0 0.0
    %332 = vmatpush1.msra.mxu0 0.0
    %333 = vmatprep.subr.mxu0 0.0
    %334 = vmatpush1.msra.mxu0 0.0
    %335 = vmatprep.subr.mxu0 0.0
    %336 = vmatpush1.msra.mxu0 0.0
    %337 = vmatprep.subr.mxu0 0.0
    %338 = vmatpush1.msra.mxu0 0.0
    %339 = vmatprep.subr.mxu0 0.0
    %340 = vmatpush1.msra.mxu0 0.0
    %341 = vmatprep.subr.mxu0 0.0
    %342 = vmatpush1.msra.mxu0 0.0
    %343 = vmatprep.subr.mxu0 0.0
    %344 = vmatpush1.msra.mxu0 0.0
    %345 = vmatprep.subr.mxu0 0.0
    %346 = vmatpush1.msra.mxu0 0.0
    %347 = vmatprep.subr.mxu0 0.0
    %348 = vmatpush1.msra.mxu0 0.0
    %349 = vmatprep.subr.mxu0 0.0
    %350 = vmatpush1.msra.mxu0 0.0
    %351 = vmatprep.subr.mxu0 0.0
    %352 = vmatpush1.msra.mxu0 0.0
    %353 = vmatprep.subr.mxu0 0.0
    %354 = vmatpush1.msra.mxu0 0.0
    %355 = vmatprep.subr.mxu0 0.0
    %356 = vmatpush1.msra.mxu0 0.0
    %357 = vmatprep.subr.mxu0 0.0
    %358 = vmatpush1.msra.mxu0 0.0
    %359 = vmatprep.subr.mxu0 0.0
    %360 = vmatpush1.msra.mxu0 0.0
    %361 = vmatprep.subr.mxu0 0.0
    %362 = vmatpush1.msra.mxu0 0.0
    %363 = vmatprep.subr.mxu0 0.0
    %364 = vmatpush1.msra.mxu0 0.0
    %365 = vmatprep.subr.mxu0 0.0
    %366 = vmatpush1.msra.mxu0 0.0
    %367 = vmatprep.subr.mxu0 0.0
    %368 = vmatpush1.msra.mxu0 0.0
    %369 = vmatprep.subr.mxu0 0.0
    %370 = vmatpush1.msra.mxu0 0.0
    %371 = vmatprep.subr.mxu0 0.0
    %372 = vmatpush1.msra.mxu0 0.0
    %373 = vmatprep.subr.mxu0 0.0
    %374 = vmatpush1.msra.mxu0 0.0
    %375 = vmatprep.subr.mxu0 0.0
    %376 = vmatpush1.msra.mxu0 0.0
    %377 = vmatprep.mubr.f32.mxu0 0.0
    %378 = vmatmul.mubr.f32.gmra.mrb[0].mxu0 %v311
    %v379 = vpop.f32.mrb[0].mxu0
    %v380 = vadd.f32 0.0, %v379
    %v381 = vpop.f32.mrb[0].mxu0
    %382 = vdwg.mxu0
    %383 = vrot.lane.b32.xlu0 %v125, 64
    %v384 = vpop.permute.xlu0 %383
    %v387 = vsel %vm282, %v306, 0
    %389 = vmatprep.subr.mxu0 0.0
    %390 = vmatpush1.msra.mxu0 %v384
    %391 = vmatprep.subr.mxu0 0.0
    %392 = vmatpush1.msra.mxu0 0.0
    %393 = vmatprep.subr.mxu0 0.0
    %394 = vmatpush1.msra.mxu0 0.0
    %395 = vmatprep.subr.mxu0 0.0
    %396 = vmatpush1.msra.mxu0 0.0
    %397 = vmatprep.subr.mxu0 0.0
    %398 = vmatpush1.msra.mxu0 0.0
    %399 = vmatprep.subr.mxu0 0.0
    %400 = vmatpush1.msra.mxu0 0.0
    %401 = vmatprep.subr.mxu0 0.0
    %402 = vmatpush1.msra.mxu0 0.0
    %403 = vmatprep.subr.mxu0 0.0
    %404 = vmatpush1.msra.mxu0 0.0
    %405 = vmatprep.subr.mxu0 0.0
    %406 = vmatpush1.msra.mxu0 0.0
    %407 = vmatprep.subr.mxu0 0.0
    %408 = vmatpush1.msra.mxu0 0.0
    %409 = vmatprep.subr.mxu0 0.0
    %410 = vmatpush1.msra.mxu0 0.0
    %411 = vmatprep.subr.mxu0 0.0
    %412 = vmatpush1.msra.mxu0 0.0
    %413 = vmatprep.subr.mxu0 0.0
    %414 = vmatpush1.msra.mxu0 0.0
    %415 = vmatprep.subr.mxu0 0.0
    %416 = vmatpush1.msra.mxu0 0.0
    %417 = vmatprep.subr.mxu0 0.0
    %418 = vmatpush1.msra.mxu0 0.0
    %419 = vmatprep.subr.mxu0 0.0
    %420 = vmatpush1.msra.mxu0 0.0
    %421 = vmatprep.subr.mxu0 0.0
    %422 = vmatpush1.msra.mxu0 0.0
    %423 = vmatprep.subr.mxu0 0.0
    %424 = vmatpush1.msra.mxu0 0.0
    %425 = vmatprep.subr.mxu0 0.0
    %426 = vmatpush1.msra.mxu0 0.0
    %427 = vmatprep.subr.mxu0 0.0
    %428 = vmatpush1.msra.mxu0 0.0
    %429 = vmatprep.subr.mxu0 0.0
    %430 = vmatpush1.msra.mxu0 0.0
    %431 = vmatprep.subr.mxu0 0.0
    %432 = vmatpush1.msra.mxu0 0.0
    %433 = vmatprep.subr.mxu0 0.0
    %434 = vmatpush1.msra.mxu0 0.0
    %435 = vmatprep.subr.mxu0 0.0
    %436 = vmatpush1.msra.mxu0 0.0
    %437 = vmatprep.subr.mxu0 0.0
    %438 = vmatpush1.msra.mxu0 0.0
    %439 = vmatprep.subr.mxu0 0.0
    %440 = vmatpush1.msra.mxu0 0.0
    %441 = vmatprep.subr.mxu0 0.0
    %442 = vmatpush1.msra.mxu0 0.0
    %443 = vmatprep.subr.mxu0 0.0
    %444 = vmatpush1.msra.mxu0 0.0
    %445 = vmatprep.subr.mxu0 0.0
    %446 = vmatpush1.msra.mxu0 0.0
    %447 = vmatprep.subr.mxu0 0.0
    %448 = vmatpush1.msra.mxu0 0.0
    %449 = vmatprep.subr.mxu0 0.0
    %450 = vmatpush1.msra.mxu0 0.0
    %451 = vmatprep.subr.mxu0 0.0
    %452 = vmatpush1.msra.mxu0 0.0
    %453 = vmatprep.mubr.f32.mxu0 0.0
    %454 = vmatmul.mubr.f32.gmra.mrb[0].mxu0 %v387
    %v455 = vpop.f32.mrb[0].mxu0
    %v456 = vadd.f32 0.0, %v455
    %v457 = vpop.f32.mrb[0].mxu0
    %458 = vdwg.mxu0
    %459 = vst.msk [vmem:[#allocation7] sm:$0xff] %vm46, %v380
    %460 = vst.msk [vmem:[#allocation7 + $0x8] sm:$0xff] %vm46, %v456
    // Predicated region
    $region18: #{tpu_custom_call.1} parent=1 // pred_check
      _
    $region19: #{tpu_custom_call.1} parent=1 // pred_check_branch
      %462 = sbr.rel (0) target = $region21
    $region20: #{tpu_custom_call.1} parent=1 // pred_region
      %s464 = ssub.s32 256, 256
      %465 = vsyncadd [#allocation4], %s464
      %s466 = sshll.u32 [#allocation7], 4
      %s467 = int_to_ptr.vmem [resolvable:$true] %s466
      %472 = dma.vmem_to_hbm [thread:$0]  %s467, 256, %s2, [#allocation4], 128, 128, 8
    $region21: #{tpu_custom_call.1} parent=1 // pred_fallthru
      _
    // Predicated region
    $region22: #{tpu_custom_call.1} parent=1 // pred_check
      _
    $region23: #{tpu_custom_call.1} parent=1 // pred_check_branch
      %474 = sbr.rel (0) target = $region25
    $region24: #{tpu_custom_call.1} parent=1 // pred_region
      %475 = dma.done [#allocation4], 256
    $region25: #{tpu_custom_call.1} parent=1 // pred_fallthru
      _
    %476 = vsyncpa [#allocation3], 1
    %477 = vsyncpa [#allocation6], 1
    %478 = vsyncpa [#allocation4], 1

</llo_original>
